<compile_context>
chip_gen: v5e
topology: v5e:2x2
jax: 0.10.0
libtpu: 0.0.40
codegen_flags: <defaults>
</compile_context>

<pallas_src>
import math

import jax
import jax.numpy as jnp
from jax.experimental import pallas as pl
from jax.experimental.pallas import tpu as pltpu

HIDDEN = 256
IN_DIM = 4
OUT_DIM = 3
OUT_PAD = 128        # padded N of the last matmul (one MXU N-tile either way)
NEG_SLOPE = 0.01     # PyTorch F.leaky_relu default
LANE = 128
SUBLANE = 8


def _round_up(n, m):
    return ((n + m - 1) // m) * m


def _leaky_relu(x):
    return jnp.where(x > 0, x, NEG_SLOPE * x)


def inv_dynamics_kernel(x_ref,
                        w1_ref, b1_ref,
                        w2_ref, b2_ref,
                        w3_ref, b3_ref,
                        w4_ref, b4_ref,
                        w5_ref, b5_ref,
                        o_ref):
    # Layer 1 (K=4): four f32 VPU broadcast-FMAs -- no zero-padded K=128 MXU
    # pass, and the tiny first layer keeps full f32 precision.
    x = x_ref[...]                                    # (TB, 4) f32
    acc = x[:, 0:1] * w1_ref[0:1, :]
    for i in range(1, IN_DIM):
        acc = acc + x[:, i:i + 1] * w1_ref[i:i + 1, :]
    h = _leaky_relu(acc + b1_ref[...]).astype(jnp.bfloat16)   # (TB, 256) bf16

    # Hidden layers 2-4: bf16 MXU matmuls with f32 accumulation; bias add and
    # leaky_relu in f32, single cast back to bf16. dropout(p=0.0) -> identity.
    for w_ref, b_ref in ((w2_ref, b2_ref), (w3_ref, b3_ref), (w4_ref, b4_ref)):
        acc = jnp.dot(h, w_ref[...], preferred_element_type=jnp.float32)
        h = _leaky_relu(acc + b_ref[...]).astype(jnp.bfloat16)

    # Layer 5: (TB,256) @ (256,128) -> f32 logits (only first 3 columns real).
    logits = jnp.dot(h, w5_ref[...],
                     preferred_element_type=jnp.float32) + b5_ref[...]

    # Transposed, de-padded writeback: XLU transpose then store only the 3 real
    # logit rows. Out block (OUT_DIM, TB) keeps the last dim lane-dense while
    # HBM writeback drops from 512 B/row to 12 B/row.
    o_ref[...] = jnp.transpose(logits)[:OUT_DIM, :].astype(o_ref.dtype)


def prepare_params(params):
    """One-time conversion of f32 (PyTorch-equivalent) params into the kernel's
    resident form: f32 w1/b1 (VPU layer-1 path), bf16 hidden weights, and the
    3->128 zero-padded output edge. Call once and reuse the result."""
    w5 = jnp.zeros((HIDDEN, OUT_PAD), jnp.bfloat16)
    w5 = w5.at[:, :OUT_DIM].set(params["w5"].astype(jnp.bfloat16))
    b5 = jnp.zeros((1, OUT_PAD), jnp.float32)
    b5 = b5.at[:, :OUT_DIM].set(params["b5"].astype(jnp.float32))
    return dict(
        w1=params["w1"].astype(jnp.float32), b1=params["b1"].astype(jnp.float32),
        w2=params["w2"].astype(jnp.bfloat16), b2=params["b2"].astype(jnp.float32),
        w3=params["w3"].astype(jnp.bfloat16), b3=params["b3"].astype(jnp.float32),
        w4=params["w4"].astype(jnp.bfloat16), b4=params["b4"].astype(jnp.float32),
        w5=w5, b5=b5,
    )


def _choose_tile(batch, batch_tile):
    """Pick (TB, B_pad). Multi-tile TB is a multiple of 128 (keeps the
    transposed out block lane-dense) and <= half the batch so >= 2 tiles land
    on v7x's two TensorCores; small batches stay a single 8-rounded tile."""
    b8 = _round_up(max(batch, 1), SUBLANE)
    if b8 < 2 * LANE:
        tb = b8
    else:
        half = (b8 // 2) // LANE * LANE
        tb = max(LANE, min(max(batch_tile // LANE, 1) * LANE, half))
    return tb, _round_up(b8, tb)


def inv_dynamics_forward(x, prepped, *, batch_tile=1024):
    """x: (B, 4) float32. prepped: output of prepare_params().
    Returns (B, 3) float32 logits."""
    B = x.shape[0]
    TB, B_pad = _choose_tile(B, batch_tile)
    p = prepped

    # Only the batch dim is padded; feature dim stays 4 (full-dim block escape).
    x_p = jnp.pad(x.astype(jnp.float32), ((0, B_pad - B), (0, 0)))

    def full(a):
        # Grid-invariant operand: block index never changes -> DMA'd once,
        # resident across all batch tiles.
        return pl.BlockSpec(a.shape, lambda i: (0, 0))

    grid_spec = pltpu.PrefetchScalarGridSpec(
        num_scalar_prefetch=0,
        grid=(B_pad // TB,),
        in_specs=[
            pl.BlockSpec((TB, IN_DIM), lambda i: (i, 0)),   # (B,4) f32 input
            full(p["w1"]), full(p["b1"]),
            full(p["w2"]), full(p["b2"]),
            full(p["w3"]), full(p["b3"]),
            full(p["w4"]), full(p["b4"]),
            full(p["w5"]), full(p["b5"]),
        ],
        out_specs=pl.BlockSpec((OUT_DIM, TB), lambda i: (0, i)),
    )

    out = pl.pallas_call(
        inv_dynamics_kernel,
        out_shape=jax.ShapeDtypeStruct((OUT_DIM, B_pad), jnp.float32),
        grid_spec=grid_spec,
        compiler_params=pltpu.CompilerParams(
            dimension_semantics=("parallel",)),
    )(x_p, p["w1"], p["b1"], p["w2"], p["b2"], p["w3"], p["b3"],
      p["w4"], p["b4"], p["w5"], p["b5"])

    return jnp.transpose(out[:, :B])        # (B, 3) f32 logits


def xavier_uniform(key, fan_in, fan_out):
    """Xavier/Glorot uniform, matching nn.init.xavier_uniform_ semantics."""
    bound = math.sqrt(6.0 / (fan_in + fan_out))
    # PyTorch weight is (out, in); sample in that shape, then transpose so the
    # init distribution is identical, stored as (in, out) for y = x @ W + b.
    w = jax.random.uniform(key, (fan_out, fan_in), jnp.float32, -bound, bound)
    return jnp.transpose(w)


def init_params(key, hidden_size=HIDDEN):
    dims = [(IN_DIM, hidden_size),
            (hidden_size, hidden_size),
            (hidden_size, hidden_size),
            (hidden_size, hidden_size),
            (hidden_size, OUT_DIM)]
    keys = jax.random.split(key, len(dims))
    params = {}
    for idx, ((fi, fo), k) in enumerate(zip(dims, keys), start=1):
        params[f"w{idx}"] = xavier_uniform(k, fi, fo)
        params[f"b{idx}"] = jnp.zeros((1, fo), jnp.float32)   # zeros_ init
    return params


def reference_forward_f32(x, params):
    """Plain f32 JAX reference matching the PyTorch forward exactly."""
    h = x.astype(jnp.float32)
    for idx in range(1, 5):
        h = jnp.dot(h, params[f"w{idx}"]) + params[f"b{idx}"]
        h = jnp.where(h > 0, h, NEG_SLOPE * h)
    return jnp.dot(h, params["w5"]) + params["b5"]


def reference_forward_mixed(x, params):
    """Reference mirroring the kernel's precision recipe: f32 layer 1, bf16
    matmul inputs with f32 accumulation for layers 2-5."""
    h = jnp.dot(x.astype(jnp.float32), params["w1"]) + params["b1"]
    h = jnp.where(h > 0, h, NEG_SLOPE * h).astype(jnp.bfloat16)
    for idx in range(2, 5):
        w = params[f"w{idx}"].astype(jnp.bfloat16)
        h = jnp.dot(h, w, preferred_element_type=jnp.float32) + params[f"b{idx}"]
        h = jnp.where(h > 0, h, NEG_SLOPE * h).astype(jnp.bfloat16)
    w5 = params["w5"].astype(jnp.bfloat16)
    return jnp.dot(h, w5, preferred_element_type=jnp.float32) + params["b5"]


if __name__ == "__main__":
    key = jax.random.PRNGKey(0)
    pkey, xkey = jax.random.split(key)

    params = init_params(pkey)
    prepped = prepare_params(params)   # hoisted: prepared ONCE, reused per call

    # Small deterministic test batches covering the single-tile path (5, 32)
    # and the multi-tile / both-TensorCores path (256 -> two 128-row tiles).
    for B in (5, 32, 256):
        x = jax.random.normal(jax.random.fold_in(xkey, B), (B, IN_DIM),
                              jnp.float32)
        logits = jax.block_until_ready(inv_dynamics_forward(x, prepped))
        assert logits.shape == (B, OUT_DIM), logits.shape
        assert logits.dtype == jnp.float32

        ref_mixed = reference_forward_mixed(x, params)
        ref_f32 = reference_forward_f32(x, params)
        assert jnp.allclose(logits, ref_mixed, atol=1e-2, rtol=1e-2), \
            f"mismatch vs precision-matched reference at B={B}"
        assert jnp.allclose(logits, ref_f32, atol=5e-2, rtol=5e-2), \
            f"mismatch vs f32 reference at B={B}"

    print("KERNEL_OK")
</pallas_src>

<mosaic_0001>
module attributes {stable_mosaic.version = 11 : i64} {
  func.func @inv_dynamics_kernel(%arg0: i32, %arg1: memref<8x4xf32, #tpu.memory_space<vmem>>, %arg2: memref<4x256xf32, #tpu.memory_space<vmem>>, %arg3: memref<1x256xf32, #tpu.memory_space<vmem>>, %arg4: memref<256x256xbf16, #tpu.memory_space<vmem>>, %arg5: memref<1x256xf32, #tpu.memory_space<vmem>>, %arg6: memref<256x256xbf16, #tpu.memory_space<vmem>>, %arg7: memref<1x256xf32, #tpu.memory_space<vmem>>, %arg8: memref<256x256xbf16, #tpu.memory_space<vmem>>, %arg9: memref<1x256xf32, #tpu.memory_space<vmem>>, %arg10: memref<256x128xbf16, #tpu.memory_space<vmem>>, %arg11: memref<1x128xf32, #tpu.memory_space<vmem>>, %arg12: memref<3x8xf32, #tpu.memory_space<vmem>>) attributes {dimension_semantics = [#tpu.dimension_semantics<parallel>], iteration_bounds = array<i64: 1>, scalar_prefetch = 0 : i64, scratch_operands = 0 : i64, tpu.core_type = #tpu.core_type<tc>, window_params = [{transform_indices = @transform_0, window_bounds = array<i64: 8, 4>}, {pipeline_mode = #tpu.pipeline_mode<synchronous>, transform_indices = @transform_1, window_bounds = array<i64: 4, 256>}, {pipeline_mode = #tpu.pipeline_mode<synchronous>, transform_indices = @transform_2, window_bounds = array<i64: 1, 256>}, {pipeline_mode = #tpu.pipeline_mode<synchronous>, transform_indices = @transform_3, window_bounds = array<i64: 256, 256>}, {pipeline_mode = #tpu.pipeline_mode<synchronous>, transform_indices = @transform_4, window_bounds = array<i64: 1, 256>}, {pipeline_mode = #tpu.pipeline_mode<synchronous>, transform_indices = @transform_5, window_bounds = array<i64: 256, 256>}, {pipeline_mode = #tpu.pipeline_mode<synchronous>, transform_indices = @transform_6, window_bounds = array<i64: 1, 256>}, {pipeline_mode = #tpu.pipeline_mode<synchronous>, transform_indices = @transform_7, window_bounds = array<i64: 256, 256>}, {pipeline_mode = #tpu.pipeline_mode<synchronous>, transform_indices = @transform_8, window_bounds = array<i64: 1, 256>}, {pipeline_mode = #tpu.pipeline_mode<synchronous>, transform_indices = @transform_9, window_bounds = array<i64: 256, 128>}, {pipeline_mode = #tpu.pipeline_mode<synchronous>, transform_indices = @transform_10, window_bounds = array<i64: 1, 128>}, {transform_indices = @transform_11, window_bounds = array<i64: 3, 8>}]} {
    %c0 = arith.constant 0 : index
    %c0_0 = arith.constant 0 : index
    %0 = vector.load %arg1[%c0, %c0_0] : memref<8x4xf32, #tpu.memory_space<vmem>>, vector<8x4xf32>
    %1 = vector.extract_strided_slice %0 {offsets = [0, 0], sizes = [8, 1], strides = [1, 1]} : vector<8x4xf32> to vector<8x1xf32>
    %c0_1 = arith.constant 0 : index
    %c0_2 = arith.constant 0 : index
    %2 = vector.load %arg2[%c0_1, %c0_2] : memref<4x256xf32, #tpu.memory_space<vmem>>, vector<1x256xf32>
    %3 = vector.broadcast %1 : vector<8x1xf32> to vector<8x256xf32>
    %4 = vector.broadcast %2 : vector<1x256xf32> to vector<8x256xf32>
    %5 = arith.mulf %3, %4 : vector<8x256xf32>
    %6 = vector.extract_strided_slice %0 {offsets = [0, 1], sizes = [8, 1], strides = [1, 1]} : vector<8x4xf32> to vector<8x1xf32>
    %c1 = arith.constant 1 : index
    %c0_3 = arith.constant 0 : index
    %7 = vector.load %arg2[%c1, %c0_3] : memref<4x256xf32, #tpu.memory_space<vmem>>, vector<1x256xf32>
    %8 = vector.broadcast %6 : vector<8x1xf32> to vector<8x256xf32>
    %9 = vector.broadcast %7 : vector<1x256xf32> to vector<8x256xf32>
    %10 = arith.mulf %8, %9 : vector<8x256xf32>
    %11 = arith.addf %5, %10 : vector<8x256xf32>
    %12 = vector.extract_strided_slice %0 {offsets = [0, 2], sizes = [8, 1], strides = [1, 1]} : vector<8x4xf32> to vector<8x1xf32>
    %c2 = arith.constant 2 : index
    %c0_4 = arith.constant 0 : index
    %13 = vector.load %arg2[%c2, %c0_4] : memref<4x256xf32, #tpu.memory_space<vmem>>, vector<1x256xf32>
    %14 = vector.broadcast %12 : vector<8x1xf32> to vector<8x256xf32>
    %15 = vector.broadcast %13 : vector<1x256xf32> to vector<8x256xf32>
    %16 = arith.mulf %14, %15 : vector<8x256xf32>
    %17 = arith.addf %11, %16 : vector<8x256xf32>
    %18 = vector.extract_strided_slice %0 {offsets = [0, 3], sizes = [8, 1], strides = [1, 1]} : vector<8x4xf32> to vector<8x1xf32>
    %c3 = arith.constant 3 : index
    %c0_5 = arith.constant 0 : index
    %19 = vector.load %arg2[%c3, %c0_5] : memref<4x256xf32, #tpu.memory_space<vmem>>, vector<1x256xf32>
    %20 = vector.broadcast %18 : vector<8x1xf32> to vector<8x256xf32>
    %21 = vector.broadcast %19 : vector<1x256xf32> to vector<8x256xf32>
    %22 = arith.mulf %20, %21 : vector<8x256xf32>
    %23 = arith.addf %17, %22 : vector<8x256xf32>
    %c0_6 = arith.constant 0 : index
    %c0_7 = arith.constant 0 : index
    %24 = vector.load %arg3[%c0_6, %c0_7] : memref<1x256xf32, #tpu.memory_space<vmem>>, vector<1x256xf32>
    %25 = vector.broadcast %24 : vector<1x256xf32> to vector<8x256xf32>
    %26 = arith.addf %23, %25 : vector<8x256xf32>
    %cst = arith.constant 0.000000e+00 : f32
    %27 = vector.broadcast %cst : f32 to vector<8x256xf32>
    %28 = arith.cmpf ogt, %26, %27 : vector<8x256xf32>
    %cst_8 = arith.constant 0.00999999977 : f32
    %29 = vector.broadcast %cst_8 : f32 to vector<8x256xf32>
    %30 = arith.mulf %29, %26 : vector<8x256xf32>
    %31 = arith.select %28, %26, %30 : vector<8x256xi1>, vector<8x256xf32>
    %32 = arith.truncf %31 : vector<8x256xf32> to vector<8x256xbf16>
    %c0_9 = arith.constant 0 : index
    %c0_10 = arith.constant 0 : index
    %33 = vector.load %arg4[%c0_9, %c0_10] : memref<256x256xbf16, #tpu.memory_space<vmem>>, vector<256x256xbf16>
    %cst_11 = arith.constant dense<0.000000e+00> : vector<8x256xf32>
    %34 = tpu.matmul %32, %33, %cst_11 {dimension_numbers = #tpu.dot_dimension_numbers<[1], [0], [0], [1], [0, 0, 1, 1], [], []>} : vector<8x256xbf16>, vector<256x256xbf16>, vector<8x256xf32> -> vector<8x256xf32>
    %c0_12 = arith.constant 0 : index
    %c0_13 = arith.constant 0 : index
    %35 = vector.load %arg5[%c0_12, %c0_13] : memref<1x256xf32, #tpu.memory_space<vmem>>, vector<1x256xf32>
    %36 = vector.broadcast %35 : vector<1x256xf32> to vector<8x256xf32>
    %37 = arith.addf %34, %36 : vector<8x256xf32>
    %cst_14 = arith.constant 0.000000e+00 : f32
    %38 = vector.broadcast %cst_14 : f32 to vector<8x256xf32>
    %39 = arith.cmpf ogt, %37, %38 : vector<8x256xf32>
    %cst_15 = arith.constant 0.00999999977 : f32
    %40 = vector.broadcast %cst_15 : f32 to vector<8x256xf32>
    %41 = arith.mulf %40, %37 : vector<8x256xf32>
    %42 = arith.select %39, %37, %41 : vector<8x256xi1>, vector<8x256xf32>
    %43 = arith.truncf %42 : vector<8x256xf32> to vector<8x256xbf16>
    %c0_16 = arith.constant 0 : index
    %c0_17 = arith.constant 0 : index
    %44 = vector.load %arg6[%c0_16, %c0_17] : memref<256x256xbf16, #tpu.memory_space<vmem>>, vector<256x256xbf16>
    %cst_18 = arith.constant dense<0.000000e+00> : vector<8x256xf32>
    %45 = tpu.matmul %43, %44, %cst_18 {dimension_numbers = #tpu.dot_dimension_numbers<[1], [0], [0], [1], [0, 0, 1, 1], [], []>} : vector<8x256xbf16>, vector<256x256xbf16>, vector<8x256xf32> -> vector<8x256xf32>
    %c0_19 = arith.constant 0 : index
    %c0_20 = arith.constant 0 : index
    %46 = vector.load %arg7[%c0_19, %c0_20] : memref<1x256xf32, #tpu.memory_space<vmem>>, vector<1x256xf32>
    %47 = vector.broadcast %46 : vector<1x256xf32> to vector<8x256xf32>
    %48 = arith.addf %45, %47 : vector<8x256xf32>
    %cst_21 = arith.constant 0.000000e+00 : f32
    %49 = vector.broadcast %cst_21 : f32 to vector<8x256xf32>
    %50 = arith.cmpf ogt, %48, %49 : vector<8x256xf32>
    %cst_22 = arith.constant 0.00999999977 : f32
    %51 = vector.broadcast %cst_22 : f32 to vector<8x256xf32>
    %52 = arith.mulf %51, %48 : vector<8x256xf32>
    %53 = arith.select %50, %48, %52 : vector<8x256xi1>, vector<8x256xf32>
    %54 = arith.truncf %53 : vector<8x256xf32> to vector<8x256xbf16>
    %c0_23 = arith.constant 0 : index
    %c0_24 = arith.constant 0 : index
    %55 = vector.load %arg8[%c0_23, %c0_24] : memref<256x256xbf16, #tpu.memory_space<vmem>>, vector<256x256xbf16>
    %cst_25 = arith.constant dense<0.000000e+00> : vector<8x256xf32>
    %56 = tpu.matmul %54, %55, %cst_25 {dimension_numbers = #tpu.dot_dimension_numbers<[1], [0], [0], [1], [0, 0, 1, 1], [], []>} : vector<8x256xbf16>, vector<256x256xbf16>, vector<8x256xf32> -> vector<8x256xf32>
    %c0_26 = arith.constant 0 : index
    %c0_27 = arith.constant 0 : index
    %57 = vector.load %arg9[%c0_26, %c0_27] : memref<1x256xf32, #tpu.memory_space<vmem>>, vector<1x256xf32>
    %58 = vector.broadcast %57 : vector<1x256xf32> to vector<8x256xf32>
    %59 = arith.addf %56, %58 : vector<8x256xf32>
    %cst_28 = arith.constant 0.000000e+00 : f32
    %60 = vector.broadcast %cst_28 : f32 to vector<8x256xf32>
    %61 = arith.cmpf ogt, %59, %60 : vector<8x256xf32>
    %cst_29 = arith.constant 0.00999999977 : f32
    %62 = vector.broadcast %cst_29 : f32 to vector<8x256xf32>
    %63 = arith.mulf %62, %59 : vector<8x256xf32>
    %64 = arith.select %61, %59, %63 : vector<8x256xi1>, vector<8x256xf32>
    %65 = arith.truncf %64 : vector<8x256xf32> to vector<8x256xbf16>
    %c0_30 = arith.constant 0 : index
    %c0_31 = arith.constant 0 : index
    %66 = vector.load %arg10[%c0_30, %c0_31] : memref<256x128xbf16, #tpu.memory_space<vmem>>, vector<256x128xbf16>
    %cst_32 = arith.constant dense<0.000000e+00> : vector<8x128xf32>
    %67 = tpu.matmul %65, %66, %cst_32 {dimension_numbers = #tpu.dot_dimension_numbers<[1], [0], [0], [1], [0, 0, 1, 1], [], []>} : vector<8x256xbf16>, vector<256x128xbf16>, vector<8x128xf32> -> vector<8x128xf32>
    %c0_33 = arith.constant 0 : index
    %c0_34 = arith.constant 0 : index
    %68 = vector.load %arg11[%c0_33, %c0_34] : memref<1x128xf32, #tpu.memory_space<vmem>>, vector<1x128xf32>
    %69 = vector.broadcast %68 : vector<1x128xf32> to vector<8x128xf32>
    %70 = arith.addf %67, %69 : vector<8x128xf32>
    %71 = tpu.transpose %70, [1, 0] : vector<8x128xf32> -> vector<128x8xf32>
    %72 = vector.extract_strided_slice %71 {offsets = [0, 0], sizes = [3, 8], strides = [1, 1]} : vector<128x8xf32> to vector<3x8xf32>
    %c0_35 = arith.constant 0 : index
    %c0_36 = arith.constant 0 : index
    %73 = vector.load %arg12[%c0_35, %c0_36] : memref<3x8xf32, #tpu.memory_space<vmem>>, vector<3x8xf32>
    tpu.vector_store %arg12[%c0_35, %c0_36], %72 {strides = array<i32>} : memref<3x8xf32, #tpu.memory_space<vmem>>, vector<3x8xf32>,
    return
  }
  func.func @transform_0(%arg0: i32) -> (i32, i32) {
    %c0_i32 = arith.constant 0 : i32
    %c0_i32_0 = arith.constant 0 : i32
    return %arg0, %c0_i32 : i32, i32
  }
  func.func @transform_1(%arg0: i32) -> (i32, i32) {
    %c0_i32 = arith.constant 0 : i32
    %c0_i32_0 = arith.constant 0 : i32
    %c0_i32_1 = arith.constant 0 : i32
    return %c0_i32, %c0_i32_0 : i32, i32
  }
  func.func @transform_2(%arg0: i32) -> (i32, i32) {
    %c0_i32 = arith.constant 0 : i32
    %c0_i32_0 = arith.constant 0 : i32
    %c0_i32_1 = arith.constant 0 : i32
    return %c0_i32, %c0_i32_0 : i32, i32
  }
  func.func @transform_3(%arg0: i32) -> (i32, i32) {
    %c0_i32 = arith.constant 0 : i32
    %c0_i32_0 = arith.constant 0 : i32
    %c0_i32_1 = arith.constant 0 : i32
    return %c0_i32, %c0_i32_0 : i32, i32
  }
  func.func @transform_4(%arg0: i32) -> (i32, i32) {
    %c0_i32 = arith.constant 0 : i32
    %c0_i32_0 = arith.constant 0 : i32
    %c0_i32_1 = arith.constant 0 : i32
    return %c0_i32, %c0_i32_0 : i32, i32
  }
  func.func @transform_5(%arg0: i32) -> (i32, i32) {
    %c0_i32 = arith.constant 0 : i32
    %c0_i32_0 = arith.constant 0 : i32
    %c0_i32_1 = arith.constant 0 : i32
    return %c0_i32, %c0_i32_0 : i32, i32
  }
  func.func @transform_6(%arg0: i32) -> (i32, i32) {
    %c0_i32 = arith.constant 0 : i32
    %c0_i32_0 = arith.constant 0 : i32
    %c0_i32_1 = arith.constant 0 : i32
    return %c0_i32, %c0_i32_0 : i32, i32
  }
  func.func @transform_7(%arg0: i32) -> (i32, i32) {
    %c0_i32 = arith.constant 0 : i32
    %c0_i32_0 = arith.constant 0 : i32
    %c0_i32_1 = arith.constant 0 : i32
    return %c0_i32, %c0_i32_0 : i32, i32
  }
  func.func @transform_8(%arg0: i32) -> (i32, i32) {
    %c0_i32 = arith.constant 0 : i32
    %c0_i32_0 = arith.constant 0 : i32
    %c0_i32_1 = arith.constant 0 : i32
    return %c0_i32, %c0_i32_0 : i32, i32
  }
  func.func @transform_9(%arg0: i32) -> (i32, i32) {
    %c0_i32 = arith.constant 0 : i32
    %c0_i32_0 = arith.constant 0 : i32
    %c0_i32_1 = arith.constant 0 : i32
    return %c0_i32, %c0_i32_0 : i32, i32
  }
  func.func @transform_10(%arg0: i32) -> (i32, i32) {
    %c0_i32 = arith.constant 0 : i32
    %c0_i32_0 = arith.constant 0 : i32
    %c0_i32_1 = arith.constant 0 : i32
    return %c0_i32, %c0_i32_0 : i32, i32
  }
  func.func @transform_11(%arg0: i32) -> (i32, i32) {
    %c0_i32 = arith.constant 0 : i32
    %c0_i32_0 = arith.constant 0 : i32
    return %c0_i32, %arg0 : i32, i32
  }
}

</mosaic_0001>

<llo_original>
// kernel: tpu_custom_call.1
$region0: #{tpu_custom_call.1}
  #allocation0 [shape = 'u32[]', space=smem, size = 0x4, offset = 0x4, fixed_abs, tag = 'smem constant byte address 0x4 - core index']
  #allocation1 [shape = 'u32[72,128]{1,0:T(1,128)}', space=vmem, size = 0x9000, scoped, tag = 'internal scratch']
  %s0 = inlined_call_operand.vmem [shape: f32[8,4], index: 0, kind: input, shape index: {}]
  %s1 = inlined_call_operand.vmem [shape: f32[4,256], index: 1, kind: input, shape index: {}]
  %s2 = inlined_call_operand.vmem [shape: f32[1,256], index: 2, kind: input, shape index: {}]
  %s3 = inlined_call_operand.hbm [shape: bf16[256,256], index: 3, kind: input, shape index: {}]
  %s4 = inlined_call_operand.vmem [shape: f32[1,256], index: 4, kind: input, shape index: {}]
  %s5 = inlined_call_operand.hbm [shape: bf16[256,256], index: 5, kind: input, shape index: {}]
  %s6 = inlined_call_operand.vmem [shape: f32[1,256], index: 6, kind: input, shape index: {}]
  %s7 = inlined_call_operand.hbm [shape: bf16[256,256], index: 7, kind: input, shape index: {}]
  %s8 = inlined_call_operand.vmem [shape: f32[1,256], index: 8, kind: input, shape index: {}]
  %s9 = inlined_call_operand.hbm [shape: bf16[256,128], index: 9, kind: input, shape index: {}]
  %s10 = inlined_call_operand.vmem [shape: f32[1,128], index: 10, kind: input, shape index: {}]
  %s11 = inlined_call_operand.hbm [shape: f32[3,8], index: 11, kind: output, shape index: {}]
  %s12 = sld [smem:[#allocation0]]
  $region70: #{tpu_custom_call.1} parent=0
    _
  %s14 = ssub.s32 1, %s12
  %s15 = scalar_select 0, %s14, %s12
  $region1: #{tpu_custom_call.1} parent=0
    #allocation2 [shape = 'u8[131072]{0}', space=vmem, size = 0x20000, scoped, tag = 'input window, operand 3, single buffered']
    #allocation3 [shape = 's32[1]{0}', space=sflag, size = 0x4, scoped, tag = 'scoped memory for tpu_custom_call.1']
    #allocation4 [shape = 's32[1]{0}', space=sflag, size = 0x4, scoped, tag = 'scoped memory for tpu_custom_call.1']
    #allocation5 [shape = 'u8[131072]{0}', space=vmem, size = 0x20000, scoped, tag = 'input window, operand 5, single buffered']
    #allocation6 [shape = 's32[1]{0}', space=sflag, size = 0x4, scoped, tag = 'scoped memory for tpu_custom_call.1']
    #allocation7 [shape = 'u8[131072]{0}', space=vmem, size = 0x20000, scoped, tag = 'input window, operand 7, single buffered']
    #allocation8 [shape = 'u8[65536]{0}', space=vmem, size = 0x10000, scoped, tag = 'input window, operand 9, single buffered']
    #allocation9 [shape = 's32[1]{0}', space=sflag, size = 0x4, scoped, tag = 'scoped memory for tpu_custom_call.1']
    #allocation10 [shape = 'u8[2048]{0}', space=vmem, size = 0x800, scoped, tag = 'output window, operand 0, single buffered']
    %16 = vsyncpa [#allocation3], 0
    %17 = vsyncpa [#allocation6], 0
    %18 = vsyncpa [#allocation9], 0
    %19 = vsyncpa [#allocation4], 0
    // Predicated region
    $region2: #{tpu_custom_call.1} parent=1 // pred_check
      _
    $region3: #{tpu_custom_call.1} parent=1 // pred_check_branch
      %21 = sbr.rel (0) target = $region5
    $region4: #{tpu_custom_call.1} parent=1 // pred_region
      _
    $region5: #{tpu_custom_call.1} parent=1 // pred_fallthru
      _
    // Predicated region
    $region6: #{tpu_custom_call.1} parent=1 // pred_check
      _
    $region7: #{tpu_custom_call.1} parent=1 // pred_check_branch
      %23 = sbr.rel (0) target = $region9
    $region8: #{tpu_custom_call.1} parent=1 // pred_region
      _
    $region9: #{tpu_custom_call.1} parent=1 // pred_fallthru
      _
    // Predicated region
    $region10: #{tpu_custom_call.1} parent=1 // pred_check
      _
    $region11: #{tpu_custom_call.1} parent=1 // pred_check_branch
      %25 = sbr.rel (0) target = $region13
    $region12: #{tpu_custom_call.1} parent=1 // pred_region
      _
    $region13: #{tpu_custom_call.1} parent=1 // pred_fallthru
      _
    // Predicated region
    $region14: #{tpu_custom_call.1} parent=1 // pred_check
      _
    $region15: #{tpu_custom_call.1} parent=1 // pred_check_branch
      %27 = sbr.rel (0) target = $region17
    $region16: #{tpu_custom_call.1} parent=1 // pred_region
      %29 = vsyncadd [#allocation3], 0
      %s30 = sshll.u32 %s3, 4
      %s31 = int_to_ptr.hbm [resolvable:$true] %s30
      %s32 = sshll.u32 [#allocation2], 4
      %s33 = int_to_ptr.vmem [resolvable:$true] %s32
      %38 = dma.hbm_to_vmem [thread:$0]  %s31, 4096, %s33, [#allocation3], 128, 128, 8
    $region17: #{tpu_custom_call.1} parent=1 // pred_fallthru
      _
    // Predicated region
    $region18: #{tpu_custom_call.1} parent=1 // pred_check
      _
    $region19: #{tpu_custom_call.1} parent=1 // pred_check_branch
      %40 = sbr.rel (0) target = $region21
    $region20: #{tpu_custom_call.1} parent=1 // pred_region
      _
    $region21: #{tpu_custom_call.1} parent=1 // pred_fallthru
      _
    // Predicated region
    $region22: #{tpu_custom_call.1} parent=1 // pred_check
      _
    $region23: #{tpu_custom_call.1} parent=1 // pred_check_branch
      %42 = sbr.rel (0) target = $region25
    $region24: #{tpu_custom_call.1} parent=1 // pred_region
      %44 = vsyncadd [#allocation6], 0
      %s45 = sshll.u32 %s5, 4
      %s46 = int_to_ptr.hbm [resolvable:$true] %s45
      %s47 = sshll.u32 [#allocation5], 4
      %s48 = int_to_ptr.vmem [resolvable:$true] %s47
      %53 = dma.hbm_to_vmem [thread:$0]  %s46, 4096, %s48, [#allocation6], 128, 128, 8
    $region25: #{tpu_custom_call.1} parent=1 // pred_fallthru
      _
    // Predicated region
    $region26: #{tpu_custom_call.1} parent=1 // pred_check
      _
    $region27: #{tpu_custom_call.1} parent=1 // pred_check_branch
      %55 = sbr.rel (0) target = $region29
    $region28: #{tpu_custom_call.1} parent=1 // pred_region
      _
    $region29: #{tpu_custom_call.1} parent=1 // pred_fallthru
      _
    // Predicated region
    $region30: #{tpu_custom_call.1} parent=1 // pred_check
      _
    $region31: #{tpu_custom_call.1} parent=1 // pred_check_branch
      %57 = sbr.rel (0) target = $region33
    $region32: #{tpu_custom_call.1} parent=1 // pred_region
      %59 = vsyncadd [#allocation6], 0
      %s60 = sshll.u32 %s7, 4
      %s61 = int_to_ptr.hbm [resolvable:$true] %s60
      %s62 = sshll.u32 [#allocation7], 4
      %s63 = int_to_ptr.vmem [resolvable:$true] %s62
      %68 = dma.hbm_to_vmem [thread:$0]  %s61, 4096, %s63, [#allocation6], 128, 128, 8
    $region33: #{tpu_custom_call.1} parent=1 // pred_fallthru
      _
    // Predicated region
    $region34: #{tpu_custom_call.1} parent=1 // pred_check
      _
    $region35: #{tpu_custom_call.1} parent=1 // pred_check_branch
      %70 = sbr.rel (0) target = $region37
    $region36: #{tpu_custom_call.1} parent=1 // pred_region
      _
    $region37: #{tpu_custom_call.1} parent=1 // pred_fallthru
      _
    // Predicated region
    $region38: #{tpu_custom_call.1} parent=1 // pred_check
      _
    $region39: #{tpu_custom_call.1} parent=1 // pred_check_branch
      %72 = sbr.rel (0) target = $region41
    $region40: #{tpu_custom_call.1} parent=1 // pred_region
      %74 = vsyncadd [#allocation9], 0
      %s75 = sshll.u32 %s9, 4
      %s76 = int_to_ptr.hbm [resolvable:$true] %s75
      %s77 = sshll.u32 [#allocation8], 4
      %s78 = int_to_ptr.vmem [resolvable:$true] %s77
      %83 = dma.hbm_to_vmem [thread:$0]  %s76, 2048, %s78, [#allocation9], 64, 64, 4
    $region41: #{tpu_custom_call.1} parent=1 // pred_fallthru
      _
    // Predicated region
    $region42: #{tpu_custom_call.1} parent=1 // pred_check
      _
    $region43: #{tpu_custom_call.1} parent=1 // pred_check_branch
      %85 = sbr.rel (0) target = $region45
    $region44: #{tpu_custom_call.1} parent=1 // pred_region
      _
    $region45: #{tpu_custom_call.1} parent=1 // pred_fallthru
      _
    // Predicated region
    $region46: #{tpu_custom_call.1} parent=1 // pred_check
      _
    $region47: #{tpu_custom_call.1} parent=1 // pred_check_branch
      %87 = sbr.rel (0) target = $region49
    $region48: #{tpu_custom_call.1} parent=1 // pred_region
      %89 = dma.done [#allocation3], 4096
    $region49: #{tpu_custom_call.1} parent=1 // pred_fallthru
      _
    // Predicated region
    $region50: #{tpu_custom_call.1} parent=1 // pred_check
      _
    $region51: #{tpu_custom_call.1} parent=1 // pred_check_branch
      %91 = sbr.rel (0) target = $region53
    $region52: #{tpu_custom_call.1} parent=1 // pred_region
      %93 = dma.done [#allocation6], 4096
    $region53: #{tpu_custom_call.1} parent=1 // pred_fallthru
      _
    // Predicated region
    $region54: #{tpu_custom_call.1} parent=1 // pred_check
      _
    $region55: #{tpu_custom_call.1} parent=1 // pred_check_branch
      %95 = sbr.rel (0) target = $region57
    $region56: #{tpu_custom_call.1} parent=1 // pred_region
      %97 = dma.done [#allocation6], 4096
    $region57: #{tpu_custom_call.1} parent=1 // pred_fallthru
      _
    // Predicated region
    $region58: #{tpu_custom_call.1} parent=1 // pred_check
      _
    $region59: #{tpu_custom_call.1} parent=1 // pred_check_branch
      %99 = sbr.rel (0) target = $region61
    $region60: #{tpu_custom_call.1} parent=1 // pred_region
      %101 = dma.done [#allocation9], 2048
    $region61: #{tpu_custom_call.1} parent=1 // pred_fallthru
      _
    %v102 = vld [vmem:[%s0] sm:$0xff]
    %v103 = vld [vmem:[%s1] ss:$4 sm:$0x3]
    %105 = vset.pattern.permute.xlu0 0
    %106 = vperm.xlu0 %105, %v102
    %v107 = vpop.permute.xlu0 %106
    %v110 = vperm.slane %v103, 0
    %v111 = vperm.slane %v103, 1
    %v114 = vmul.f32 %v107, %v110
    %v115 = vmul.f32 %v107, %v111
    %s116 = scalar_lea.vmem %s1, 1
    %v117 = vld [vmem:[%s116] ss:$4 sm:$0x3]
    %118 = vset.pattern.permute.xlu0 1
    %119 = vperm.xlu0 %118, %v102
    %v120 = vpop.permute.xlu0 %119
    %v123 = vperm.slane %v117, 0
    %v124 = vperm.slane %v117, 1
    %v127 = vmul.f32 %v120, %v123
    %v128 = vmul.f32 %v120, %v124
    %v129 = vadd.f32 %v114, %v127
    %v130 = vadd.f32 %v115, %v128
    %s131 = scalar_lea.vmem %s1, 2
    %v132 = vld [vmem:[%s131] ss:$4 sm:$0x3]
    %133 = vset.pattern.permute.xlu0 2
    %134 = vperm.xlu0 %133, %v102
    %v135 = vpop.permute.xlu0 %134
    %v138 = vperm.slane %v132, 0
    %v139 = vperm.slane %v132, 1
    %v142 = vmul.f32 %v135, %v138
    %v143 = vmul.f32 %v135, %v139
    %v144 = vadd.f32 %v129, %v142
    %v145 = vadd.f32 %v130, %v143
    %s146 = scalar_lea.vmem %s1, 3
    %v147 = vld [vmem:[%s146] ss:$4 sm:$0x3]
    %148 = vset.pattern.permute.xlu0 3
    %149 = vperm.xlu0 %148, %v102
    %v150 = vpop.permute.xlu0 %149
    %v153 = vperm.slane %v147, 0
    %v154 = vperm.slane %v147, 1
    %v157 = vmul.f32 %v150, %v153
    %v158 = vmul.f32 %v150, %v154
    %v159 = vadd.f32 %v144, %v157
    %v160 = vadd.f32 %v145, %v158
    %v161 = vld [vmem:[%s2] sm:$0x3]
    %v163 = vperm.slane %v161, 0
    %v164 = vperm.slane %v161, 1
    %v167 = vadd.f32 %v159, %v163
    %v168 = vadd.f32 %v160, %v164
    %vm169 = vcmp.gt.f32.partialorder %v167, 0.0
    %vm170 = vcmp.gt.f32.partialorder %v168, 0.0
    %v171 = vmul.f32 %v167, 0.01
    %v172 = vmul.f32 %v168, 0.01
    %v173 = vsel %vm169, %v167, %v171
    %v174 = vsel %vm170, %v168, %v172
    %v175 = vpack.c.bf16 %v173, %v173
    %v176 = vpack.c.bf16 %v174, %v174
    %v177 = vld [vmem:[#allocation2] sm:$0xff]
    %v178 = vld [vmem:[#allocation2 + $0x8] sm:$0xff]
    %v179 = vld [vmem:[#allocation2 + $0x10] sm:$0xff]
    %v180 = vld [vmem:[#allocation2 + $0x18] sm:$0xff]
    %v181 = vld [vmem:[#allocation2 + $0x20] sm:$0xff]
    %v182 = vld [vmem:[#allocation2 + $0x28] sm:$0xff]
    %v183 = vld [vmem:[#allocation2 + $0x30] sm:$0xff]
    %v184 = vld [vmem:[#allocation2 + $0x38] sm:$0xff]
    %v185 = vld [vmem:[#allocation2 + $0x40] sm:$0xff]
    %v186 = vld [vmem:[#allocation2 + $0x48] sm:$0xff]
    %v187 = vld [vmem:[#allocation2 + $0x50] sm:$0xff]
    %v188 = vld [vmem:[#allocation2 + $0x58] sm:$0xff]
    %v189 = vld [vmem:[#allocation2 + $0x60] sm:$0xff]
    %v190 = vld [vmem:[#allocation2 + $0x68] sm:$0xff]
    %v191 = vld [vmem:[#allocation2 + $0x70] sm:$0xff]
    %v192 = vld [vmem:[#allocation2 + $0x78] sm:$0xff]
    %v193 = vld [vmem:[#allocation2 + $0x80] sm:$0xff]
    %v194 = vld [vmem:[#allocation2 + $0x88] sm:$0xff]
    %v195 = vld [vmem:[#allocation2 + $0x90] sm:$0xff]
    %v196 = vld [vmem:[#allocation2 + $0x98] sm:$0xff]
    %v197 = vld [vmem:[#allocation2 + $0xa0] sm:$0xff]
    %v198 = vld [vmem:[#allocation2 + $0xa8] sm:$0xff]
    %v199 = vld [vmem:[#allocation2 + $0xb0] sm:$0xff]
    %v200 = vld [vmem:[#allocation2 + $0xb8] sm:$0xff]
    %v201 = vld [vmem:[#allocation2 + $0xc0] sm:$0xff]
    %v202 = vld [vmem:[#allocation2 + $0xc8] sm:$0xff]
    %v203 = vld [vmem:[#allocation2 + $0xd0] sm:$0xff]
    %v204 = vld [vmem:[#allocation2 + $0xd8] sm:$0xff]
    %v205 = vld [vmem:[#allocation2 + $0xe0] sm:$0xff]
    %v206 = vld [vmem:[#allocation2 + $0xe8] sm:$0xff]
    %v207 = vld [vmem:[#allocation2 + $0xf0] sm:$0xff]
    %v208 = vld [vmem:[#allocation2 + $0xf8] sm:$0xff]
    %v209 = vld [vmem:[%s4] sm:$0x3]
    %v211 = vperm.slane %v209, 0
    %v212 = vperm.slane %v209, 1
    %v247 = vunpack.c.l.b16 %v177
    %v248 = vunpack.c.h.b16 %v177
    %v249 = vunpack.c.l.b16 %v178
    %v250 = vunpack.c.h.b16 %v178
    %v251 = vunpack.c.l.b16 %v179
    %v252 = vunpack.c.h.b16 %v179
    %v253 = vunpack.c.l.b16 %v180
    %v254 = vunpack.c.h.b16 %v180
    %v255 = vunpack.c.l.b16 %v181
    %v256 = vunpack.c.h.b16 %v181
    %v257 = vunpack.c.l.b16 %v182
    %v258 = vunpack.c.h.b16 %v182
    %v259 = vunpack.c.l.b16 %v183
    %v260 = vunpack.c.h.b16 %v183
    %v261 = vunpack.c.l.b16 %v184
    %v262 = vunpack.c.h.b16 %v184
    %v263 = vunpack.c.l.b16 %v185
    %v264 = vunpack.c.h.b16 %v185
    %v265 = vunpack.c.l.b16 %v186
    %v266 = vunpack.c.h.b16 %v186
    %v267 = vunpack.c.l.b16 %v187
    %v268 = vunpack.c.h.b16 %v187
    %v269 = vunpack.c.l.b16 %v188
    %v270 = vunpack.c.h.b16 %v188
    %v271 = vunpack.c.l.b16 %v189
    %v272 = vunpack.c.h.b16 %v189
    %v273 = vunpack.c.l.b16 %v190
    %v274 = vunpack.c.h.b16 %v190
    %v275 = vunpack.c.l.b16 %v191
    %v276 = vunpack.c.h.b16 %v191
    %v277 = vunpack.c.l.b16 %v192
    %v278 = vunpack.c.h.b16 %v192
    %v279 = vunpack.c.l.b16 %v193
    %v280 = vunpack.c.h.b16 %v193
    %v281 = vunpack.c.l.b16 %v194
    %v282 = vunpack.c.h.b16 %v194
    %v283 = vunpack.c.l.b16 %v195
    %v284 = vunpack.c.h.b16 %v195
    %v285 = vunpack.c.l.b16 %v196
    %v286 = vunpack.c.h.b16 %v196
    %v287 = vunpack.c.l.b16 %v197
    %v288 = vunpack.c.h.b16 %v197
    %v289 = vunpack.c.l.b16 %v198
    %v290 = vunpack.c.h.b16 %v198
    %v291 = vunpack.c.l.b16 %v199
    %v292 = vunpack.c.h.b16 %v199
    %v293 = vunpack.c.l.b16 %v200
    %v294 = vunpack.c.h.b16 %v200
    %v295 = vunpack.c.l.b16 %v201
    %v296 = vunpack.c.h.b16 %v201
    %v297 = vunpack.c.l.b16 %v202
    %v298 = vunpack.c.h.b16 %v202
    %v299 = vunpack.c.l.b16 %v203
    %v300 = vunpack.c.h.b16 %v203
    %v301 = vunpack.c.l.b16 %v204
    %v302 = vunpack.c.h.b16 %v204
    %v303 = vunpack.c.l.b16 %v205
    %v304 = vunpack.c.h.b16 %v205
    %v305 = vunpack.c.l.b16 %v206
    %v306 = vunpack.c.h.b16 %v206
    %v307 = vunpack.c.l.b16 %v207
    %v308 = vunpack.c.h.b16 %v207
    %v309 = vunpack.c.l.b16 %v208
    %v310 = vunpack.c.h.b16 %v208
    %v311 = vpack.c.b16 %v249, %v247
    %v312 = vpack.c.b16 %v250, %v248
    %v313 = vpack.c.b16 %v253, %v251
    %v314 = vpack.c.b16 %v254, %v252
    %v315 = vpack.c.b16 %v257, %v255
    %v316 = vpack.c.b16 %v258, %v256
    %v317 = vpack.c.b16 %v261, %v259
    %v318 = vpack.c.b16 %v262, %v260
    %v319 = vpack.c.b16 %v265, %v263
    %v320 = vpack.c.b16 %v266, %v264
    %v321 = vpack.c.b16 %v269, %v267
    %v322 = vpack.c.b16 %v270, %v268
    %v323 = vpack.c.b16 %v273, %v271
    %v324 = vpack.c.b16 %v274, %v272
    %v325 = vpack.c.b16 %v277, %v275
    %v326 = vpack.c.b16 %v278, %v276
    %v327 = vpack.c.b16 %v281, %v279
    %v328 = vpack.c.b16 %v282, %v280
    %v329 = vpack.c.b16 %v285, %v283
    %v330 = vpack.c.b16 %v286, %v284
    %v331 = vpack.c.b16 %v289, %v287
    %v332 = vpack.c.b16 %v290, %v288
    %v333 = vpack.c.b16 %v293, %v291
    %v334 = vpack.c.b16 %v294, %v292
    %v335 = vpack.c.b16 %v297, %v295
    %v336 = vpack.c.b16 %v298, %v296
    %v337 = vpack.c.b16 %v301, %v299
    %v338 = vpack.c.b16 %v302, %v300
    %v339 = vpack.c.b16 %v305, %v303
    %v340 = vpack.c.b16 %v306, %v304
    %v341 = vpack.c.b16 %v309, %v307
    %v342 = vpack.c.b16 %v310, %v308
    %375 = vmatpush.bf16.msra.mxu0 %v325
    %376 = vmatpush.bf16.msra.mxu0 %v323
    %377 = vmatpush.bf16.msra.mxu0 %v321
    %378 = vmatpush.bf16.msra.mxu0 %v319
    %379 = vmatpush.bf16.msra.mxu0 %v317
    %380 = vmatpush.bf16.msra.mxu0 %v315
    %381 = vmatpush.bf16.msra.mxu0 %v313
    %382 = vmatpush.bf16.msra.mxu0 %v311
    %383 = vmatmul.bf16.gmra.mxu0 %v175
    %v384 = vpop.f32.mrf.mxu0
    %v385 = vadd.f32 %v211, %v384
    %v386 = vpop.f32.mrf.mxu0
    %387 = vdwg.mxu0
    %388 = vmatpush.bf16.msra.mxu0 %v341
    %389 = vmatpush.bf16.msra.mxu0 %v339
    %390 = vmatpush.bf16.msra.mxu0 %v337
    %391 = vmatpush.bf16.msra.mxu0 %v335
    %392 = vmatpush.bf16.msra.mxu0 %v333
    %393 = vmatpush.bf16.msra.mxu0 %v331
    %394 = vmatpush.bf16.msra.mxu0 %v329
    %395 = vmatpush.bf16.msra.mxu0 %v327
    %396 = vmatmul.bf16.gmra.mxu0 %v176
    %v397 = vpop.f32.mrf.mxu0
    %v398 = vadd.f32 %v385, %v397
    %v399 = vpop.f32.mrf.mxu0
    %400 = vdwg.mxu0
    %401 = vmatpush.bf16.msra.mxu0 %v326
    %402 = vmatpush.bf16.msra.mxu0 %v324
    %403 = vmatpush.bf16.msra.mxu0 %v322
    %404 = vmatpush.bf16.msra.mxu0 %v320
    %405 = vmatpush.bf16.msra.mxu0 %v318
    %406 = vmatpush.bf16.msra.mxu0 %v316
    %407 = vmatpush.bf16.msra.mxu0 %v314
    %408 = vmatpush.bf16.msra.mxu0 %v312
    %409 = vmatmul.bf16.gmra.mxu0 %v175
    %v410 = vpop.f32.mrf.mxu0
    %v411 = vadd.f32 %v212, %v410
    %v412 = vpop.f32.mrf.mxu0
    %413 = vdwg.mxu0
    %414 = vmatpush.bf16.msra.mxu0 %v342
    %415 = vmatpush.bf16.msra.mxu0 %v340
    %416 = vmatpush.bf16.msra.mxu0 %v338
    %417 = vmatpush.bf16.msra.mxu0 %v336
    %418 = vmatpush.bf16.msra.mxu0 %v334
    %419 = vmatpush.bf16.msra.mxu0 %v332
    %420 = vmatpush.bf16.msra.mxu0 %v330
    %421 = vmatpush.bf16.msra.mxu0 %v328
    %422 = vmatmul.bf16.gmra.mxu0 %v176
    %v423 = vpop.f32.mrf.mxu0
    %v424 = vadd.f32 %v411, %v423
    %v425 = vpop.f32.mrf.mxu0
    %426 = vdwg.mxu0
    %vm427 = vcmp.gt.f32.partialorder %v398, 0.0
    %vm428 = vcmp.gt.f32.partialorder %v424, 0.0
    %v429 = vmul.f32 %v398, 0.01
    %v430 = vmul.f32 %v424, 0.01
    %v431 = vsel %vm427, %v398, %v429
    %v432 = vsel %vm428, %v424, %v430
    %v433 = vpack.c.bf16 %v431, %v431
    %v434 = vpack.c.bf16 %v432, %v432
    %v435 = vld [vmem:[#allocation5] sm:$0xff]
    %v436 = vld [vmem:[#allocation5 + $0x8] sm:$0xff]
    %v437 = vld [vmem:[#allocation5 + $0x10] sm:$0xff]
    %v438 = vld [vmem:[#allocation5 + $0x18] sm:$0xff]
    %v439 = vld [vmem:[#allocation5 + $0x20] sm:$0xff]
    %v440 = vld [vmem:[#allocation5 + $0x28] sm:$0xff]
    %v441 = vld [vmem:[#allocation5 + $0x30] sm:$0xff]
    %v442 = vld [vmem:[#allocation5 + $0x38] sm:$0xff]
    %v443 = vld [vmem:[#allocation5 + $0x40] sm:$0xff]
    %v444 = vld [vmem:[#allocation5 + $0x48] sm:$0xff]
    %v445 = vld [vmem:[#allocation5 + $0x50] sm:$0xff]
    %v446 = vld [vmem:[#allocation5 + $0x58] sm:$0xff]
    %v447 = vld [vmem:[#allocation5 + $0x60] sm:$0xff]
    %v448 = vld [vmem:[#allocation5 + $0x68] sm:$0xff]
    %v449 = vld [vmem:[#allocation5 + $0x70] sm:$0xff]
    %v450 = vld [vmem:[#allocation5 + $0x78] sm:$0xff]
    %v451 = vld [vmem:[#allocation5 + $0x80] sm:$0xff]
    %v452 = vld [vmem:[#allocation5 + $0x88] sm:$0xff]
    %v453 = vld [vmem:[#allocation5 + $0x90] sm:$0xff]
    %v454 = vld [vmem:[#allocation5 + $0x98] sm:$0xff]
    %v455 = vld [vmem:[#allocation5 + $0xa0] sm:$0xff]
    %v456 = vld [vmem:[#allocation5 + $0xa8] sm:$0xff]
    %v457 = vld [vmem:[#allocation5 + $0xb0] sm:$0xff]
    %v458 = vld [vmem:[#allocation5 + $0xb8] sm:$0xff]
    %v459 = vld [vmem:[#allocation5 + $0xc0] sm:$0xff]
    %v460 = vld [vmem:[#allocation5 + $0xc8] sm:$0xff]
    %v461 = vld [vmem:[#allocation5 + $0xd0] sm:$0xff]
    %v462 = vld [vmem:[#allocation5 + $0xd8] sm:$0xff]
    %v463 = vld [vmem:[#allocation5 + $0xe0] sm:$0xff]
    %v464 = vld [vmem:[#allocation5 + $0xe8] sm:$0xff]
    %v465 = vld [vmem:[#allocation5 + $0xf0] sm:$0xff]
    %v466 = vld [vmem:[#allocation5 + $0xf8] sm:$0xff]
    %v467 = vld [vmem:[%s6] sm:$0x3]
    %v469 = vperm.slane %v467, 0
    %v470 = vperm.slane %v467, 1
    %v505 = vunpack.c.l.b16 %v435
    %v506 = vunpack.c.h.b16 %v435
    %v507 = vunpack.c.l.b16 %v436
    %v508 = vunpack.c.h.b16 %v436
    %v509 = vunpack.c.l.b16 %v437
    %v510 = vunpack.c.h.b16 %v437
    %v511 = vunpack.c.l.b16 %v438
    %v512 = vunpack.c.h.b16 %v438
    %v513 = vunpack.c.l.b16 %v439
    %v514 = vunpack.c.h.b16 %v439
    %v515 = vunpack.c.l.b16 %v440
    %v516 = vunpack.c.h.b16 %v440
    %v517 = vunpack.c.l.b16 %v441
    %v518 = vunpack.c.h.b16 %v441
    %v519 = vunpack.c.l.b16 %v442
    %v520 = vunpack.c.h.b16 %v442
    %v521 = vunpack.c.l.b16 %v443
    %v522 = vunpack.c.h.b16 %v443
    %v523 = vunpack.c.l.b16 %v444
    %v524 = vunpack.c.h.b16 %v444
    %v525 = vunpack.c.l.b16 %v445
    %v526 = vunpack.c.h.b16 %v445
    %v527 = vunpack.c.l.b16 %v446
    %v528 = vunpack.c.h.b16 %v446
    %v529 = vunpack.c.l.b16 %v447
    %v530 = vunpack.c.h.b16 %v447
    %v531 = vunpack.c.l.b16 %v448
    %v532 = vunpack.c.h.b16 %v448
    %v533 = vunpack.c.l.b16 %v449
    %v534 = vunpack.c.h.b16 %v449
    %v535 = vunpack.c.l.b16 %v450
    %v536 = vunpack.c.h.b16 %v450
    %v537 = vunpack.c.l.b16 %v451
    %v538 = vunpack.c.h.b16 %v451
    %v539 = vunpack.c.l.b16 %v452
    %v540 = vunpack.c.h.b16 %v452
    %v541 = vunpack.c.l.b16 %v453
    %v542 = vunpack.c.h.b16 %v453
    %v543 = vunpack.c.l.b16 %v454
    %v544 = vunpack.c.h.b16 %v454
    %v545 = vunpack.c.l.b16 %v455
    %v546 = vunpack.c.h.b16 %v455
    %v547 = vunpack.c.l.b16 %v456
    %v548 = vunpack.c.h.b16 %v456
    %v549 = vunpack.c.l.b16 %v457
    %v550 = vunpack.c.h.b16 %v457
    %v551 = vunpack.c.l.b16 %v458
    %v552 = vunpack.c.h.b16 %v458
    %v553 = vunpack.c.l.b16 %v459
    %v554 = vunpack.c.h.b16 %v459
    %v555 = vunpack.c.l.b16 %v460
    %v556 = vunpack.c.h.b16 %v460
    %v557 = vunpack.c.l.b16 %v461
    %v558 = vunpack.c.h.b16 %v461
    %v559 = vunpack.c.l.b16 %v462
    %v560 = vunpack.c.h.b16 %v462
    %v561 = vunpack.c.l.b16 %v463
    %v562 = vunpack.c.h.b16 %v463
    %v563 = vunpack.c.l.b16 %v464
    %v564 = vunpack.c.h.b16 %v464
    %v565 = vunpack.c.l.b16 %v465
    %v566 = vunpack.c.h.b16 %v465
    %v567 = vunpack.c.l.b16 %v466
    %v568 = vunpack.c.h.b16 %v466
    %v569 = vpack.c.b16 %v507, %v505
    %v570 = vpack.c.b16 %v508, %v506
    %v571 = vpack.c.b16 %v511, %v509
    %v572 = vpack.c.b16 %v512, %v510
    %v573 = vpack.c.b16 %v515, %v513
    %v574 = vpack.c.b16 %v516, %v514
    %v575 = vpack.c.b16 %v519, %v517
    %v576 = vpack.c.b16 %v520, %v518
    %v577 = vpack.c.b16 %v523, %v521
    %v578 = vpack.c.b16 %v524, %v522
    %v579 = vpack.c.b16 %v527, %v525
    %v580 = vpack.c.b16 %v528, %v526
    %v581 = vpack.c.b16 %v531, %v529
    %v582 = vpack.c.b16 %v532, %v530
    %v583 = vpack.c.b16 %v535, %v533
    %v584 = vpack.c.b16 %v536, %v534
    %v585 = vpack.c.b16 %v539, %v537
    %v586 = vpack.c.b16 %v540, %v538
    %v587 = vpack.c.b16 %v543, %v541
    %v588 = vpack.c.b16 %v544, %v542
    %v589 = vpack.c.b16 %v547, %v545
    %v590 = vpack.c.b16 %v548, %v546
    %v591 = vpack.c.b16 %v551, %v549
    %v592 = vpack.c.b16 %v552, %v550
    %v593 = vpack.c.b16 %v555, %v553
    %v594 = vpack.c.b16 %v556, %v554
    %v595 = vpack.c.b16 %v559, %v557
    %v596 = vpack.c.b16 %v560, %v558
    %v597 = vpack.c.b16 %v563, %v561
    %v598 = vpack.c.b16 %v564, %v562
    %v599 = vpack.c.b16 %v567, %v565
    %v600 = vpack.c.b16 %v568, %v566
    %633 = vmatpush.bf16.msra.mxu0 %v583
    %634 = vmatpush.bf16.msra.mxu0 %v581
    %635 = vmatpush.bf16.msra.mxu0 %v579
    %636 = vmatpush.bf16.msra.mxu0 %v577
    %637 = vmatpush.bf16.msra.mxu0 %v575
    %638 = vmatpush.bf16.msra.mxu0 %v573
    %639 = vmatpush.bf16.msra.mxu0 %v571
    %640 = vmatpush.bf16.msra.mxu0 %v569
    %641 = vmatmul.bf16.gmra.mxu0 %v433
    %v642 = vpop.f32.mrf.mxu0
    %v643 = vadd.f32 %v469, %v642
    %v644 = vpop.f32.mrf.mxu0
    %645 = vdwg.mxu0
    %646 = vmatpush.bf16.msra.mxu0 %v599
    %647 = vmatpush.bf16.msra.mxu0 %v597
    %648 = vmatpush.bf16.msra.mxu0 %v595
    %649 = vmatpush.bf16.msra.mxu0 %v593
    %650 = vmatpush.bf16.msra.mxu0 %v591
    %651 = vmatpush.bf16.msra.mxu0 %v589
    %652 = vmatpush.bf16.msra.mxu0 %v587
    %653 = vmatpush.bf16.msra.mxu0 %v585
    %654 = vmatmul.bf16.gmra.mxu0 %v434
    %v655 = vpop.f32.mrf.mxu0
    %v656 = vadd.f32 %v643, %v655
    %v657 = vpop.f32.mrf.mxu0
    %658 = vdwg.mxu0
    %659 = vmatpush.bf16.msra.mxu0 %v584
    %660 = vmatpush.bf16.msra.mxu0 %v582
    %661 = vmatpush.bf16.msra.mxu0 %v580
    %662 = vmatpush.bf16.msra.mxu0 %v578
    %663 = vmatpush.bf16.msra.mxu0 %v576
    %664 = vmatpush.bf16.msra.mxu0 %v574
    %665 = vmatpush.bf16.msra.mxu0 %v572
    %666 = vmatpush.bf16.msra.mxu0 %v570
    %667 = vmatmul.bf16.gmra.mxu0 %v433
    %v668 = vpop.f32.mrf.mxu0
    %v669 = vadd.f32 %v470, %v668
    %v670 = vpop.f32.mrf.mxu0
    %671 = vdwg.mxu0
    %672 = vmatpush.bf16.msra.mxu0 %v600
    %673 = vmatpush.bf16.msra.mxu0 %v598
    %674 = vmatpush.bf16.msra.mxu0 %v596
    %675 = vmatpush.bf16.msra.mxu0 %v594
    %676 = vmatpush.bf16.msra.mxu0 %v592
    %677 = vmatpush.bf16.msra.mxu0 %v590
    %678 = vmatpush.bf16.msra.mxu0 %v588
    %679 = vmatpush.bf16.msra.mxu0 %v586
    %680 = vmatmul.bf16.gmra.mxu0 %v434
    %v681 = vpop.f32.mrf.mxu0
    %v682 = vadd.f32 %v669, %v681
    %v683 = vpop.f32.mrf.mxu0
    %684 = vdwg.mxu0
    %vm685 = vcmp.gt.f32.partialorder %v656, 0.0
    %vm686 = vcmp.gt.f32.partialorder %v682, 0.0
    %v687 = vmul.f32 %v656, 0.01
    %v688 = vmul.f32 %v682, 0.01
    %v689 = vsel %vm685, %v656, %v687
    %v690 = vsel %vm686, %v682, %v688
    %v691 = vpack.c.bf16 %v689, %v689
    %v692 = vpack.c.bf16 %v690, %v690
    %v693 = vld [vmem:[#allocation7] sm:$0xff]
    %v694 = vld [vmem:[#allocation7 + $0x8] sm:$0xff]
    %v695 = vld [vmem:[#allocation7 + $0x10] sm:$0xff]
    %v696 = vld [vmem:[#allocation7 + $0x18] sm:$0xff]
    %v697 = vld [vmem:[#allocation7 + $0x20] sm:$0xff]
    %v698 = vld [vmem:[#allocation7 + $0x28] sm:$0xff]
    %v699 = vld [vmem:[#allocation7 + $0x30] sm:$0xff]
    %v700 = vld [vmem:[#allocation7 + $0x38] sm:$0xff]
    %v701 = vld [vmem:[#allocation7 + $0x40] sm:$0xff]
    %v702 = vld [vmem:[#allocation7 + $0x48] sm:$0xff]
    %v703 = vld [vmem:[#allocation7 + $0x50] sm:$0xff]
    %v704 = vld [vmem:[#allocation7 + $0x58] sm:$0xff]
    %v705 = vld [vmem:[#allocation7 + $0x60] sm:$0xff]
    %v706 = vld [vmem:[#allocation7 + $0x68] sm:$0xff]
    %v707 = vld [vmem:[#allocation7 + $0x70] sm:$0xff]
    %v708 = vld [vmem:[#allocation7 + $0x78] sm:$0xff]
    %v709 = vld [vmem:[#allocation7 + $0x80] sm:$0xff]
    %v710 = vld [vmem:[#allocation7 + $0x88] sm:$0xff]
    %v711 = vld [vmem:[#allocation7 + $0x90] sm:$0xff]
    %v712 = vld [vmem:[#allocation7 + $0x98] sm:$0xff]
    %v713 = vld [vmem:[#allocation7 + $0xa0] sm:$0xff]
    %v714 = vld [vmem:[#allocation7 + $0xa8] sm:$0xff]
    %v715 = vld [vmem:[#allocation7 + $0xb0] sm:$0xff]
    %v716 = vld [vmem:[#allocation7 + $0xb8] sm:$0xff]
    %v717 = vld [vmem:[#allocation7 + $0xc0] sm:$0xff]
    %v718 = vld [vmem:[#allocation7 + $0xc8] sm:$0xff]
    %v719 = vld [vmem:[#allocation7 + $0xd0] sm:$0xff]
    %v720 = vld [vmem:[#allocation7 + $0xd8] sm:$0xff]
    %v721 = vld [vmem:[#allocation7 + $0xe0] sm:$0xff]
    %v722 = vld [vmem:[#allocation7 + $0xe8] sm:$0xff]
    %v723 = vld [vmem:[#allocation7 + $0xf0] sm:$0xff]
    %v724 = vld [vmem:[#allocation7 + $0xf8] sm:$0xff]
    %v725 = vld [vmem:[%s8] sm:$0x3]
    %v727 = vperm.slane %v725, 0
    %v728 = vperm.slane %v725, 1
    %v763 = vunpack.c.l.b16 %v693
    %v764 = vunpack.c.h.b16 %v693
    %v765 = vunpack.c.l.b16 %v694
    %v766 = vunpack.c.h.b16 %v694
    %v767 = vunpack.c.l.b16 %v695
    %v768 = vunpack.c.h.b16 %v695
    %v769 = vunpack.c.l.b16 %v696
    %v770 = vunpack.c.h.b16 %v696
    %v771 = vunpack.c.l.b16 %v697
    %v772 = vunpack.c.h.b16 %v697
    %v773 = vunpack.c.l.b16 %v698
    %v774 = vunpack.c.h.b16 %v698
    %v775 = vunpack.c.l.b16 %v699
    %v776 = vunpack.c.h.b16 %v699
    %v777 = vunpack.c.l.b16 %v700
    %v778 = vunpack.c.h.b16 %v700
    %v779 = vunpack.c.l.b16 %v701
    %v780 = vunpack.c.h.b16 %v701
    %v781 = vunpack.c.l.b16 %v702
    %v782 = vunpack.c.h.b16 %v702
    %v783 = vunpack.c.l.b16 %v703
    %v784 = vunpack.c.h.b16 %v703
    %v785 = vunpack.c.l.b16 %v704
    %v786 = vunpack.c.h.b16 %v704
    %v787 = vunpack.c.l.b16 %v705
    %v788 = vunpack.c.h.b16 %v705
    %v789 = vunpack.c.l.b16 %v706
    %v790 = vunpack.c.h.b16 %v706
    %v791 = vunpack.c.l.b16 %v707
    %v792 = vunpack.c.h.b16 %v707
    %v793 = vunpack.c.l.b16 %v708
    %v794 = vunpack.c.h.b16 %v708
    %v795 = vunpack.c.l.b16 %v709
    %v796 = vunpack.c.h.b16 %v709
    %v797 = vunpack.c.l.b16 %v710
    %v798 = vunpack.c.h.b16 %v710
    %v799 = vunpack.c.l.b16 %v711
    %v800 = vunpack.c.h.b16 %v711
    %v801 = vunpack.c.l.b16 %v712
    %v802 = vunpack.c.h.b16 %v712
    %v803 = vunpack.c.l.b16 %v713
    %v804 = vunpack.c.h.b16 %v713
    %v805 = vunpack.c.l.b16 %v714
    %v806 = vunpack.c.h.b16 %v714
    %v807 = vunpack.c.l.b16 %v715
    %v808 = vunpack.c.h.b16 %v715
    %v809 = vunpack.c.l.b16 %v716
    %v810 = vunpack.c.h.b16 %v716
    %v811 = vunpack.c.l.b16 %v717
    %v812 = vunpack.c.h.b16 %v717
    %v813 = vunpack.c.l.b16 %v718
    %v814 = vunpack.c.h.b16 %v718
    %v815 = vunpack.c.l.b16 %v719
    %v816 = vunpack.c.h.b16 %v719
    %v817 = vunpack.c.l.b16 %v720
    %v818 = vunpack.c.h.b16 %v720
    %v819 = vunpack.c.l.b16 %v721
    %v820 = vunpack.c.h.b16 %v721
    %v821 = vunpack.c.l.b16 %v722
    %v822 = vunpack.c.h.b16 %v722
    %v823 = vunpack.c.l.b16 %v723
    %v824 = vunpack.c.h.b16 %v723
    %v825 = vunpack.c.l.b16 %v724
    %v826 = vunpack.c.h.b16 %v724
    %v827 = vpack.c.b16 %v765, %v763
    %v828 = vpack.c.b16 %v766, %v764
    %v829 = vpack.c.b16 %v769, %v767
    %v830 = vpack.c.b16 %v770, %v768
    %v831 = vpack.c.b16 %v773, %v771
    %v832 = vpack.c.b16 %v774, %v772
    %v833 = vpack.c.b16 %v777, %v775
    %v834 = vpack.c.b16 %v778, %v776
    %v835 = vpack.c.b16 %v781, %v779
    %v836 = vpack.c.b16 %v782, %v780
    %v837 = vpack.c.b16 %v785, %v783
    %v838 = vpack.c.b16 %v786, %v784
    %v839 = vpack.c.b16 %v789, %v787
    %v840 = vpack.c.b16 %v790, %v788
    %v841 = vpack.c.b16 %v793, %v791
    %v842 = vpack.c.b16 %v794, %v792
    %v843 = vpack.c.b16 %v797, %v795
    %v844 = vpack.c.b16 %v798, %v796
    %v845 = vpack.c.b16 %v801, %v799
    %v846 = vpack.c.b16 %v802, %v800
    %v847 = vpack.c.b16 %v805, %v803
    %v848 = vpack.c.b16 %v806, %v804
    %v849 = vpack.c.b16 %v809, %v807
    %v850 = vpack.c.b16 %v810, %v808
    %v851 = vpack.c.b16 %v813, %v811
    %v852 = vpack.c.b16 %v814, %v812
    %v853 = vpack.c.b16 %v817, %v815
    %v854 = vpack.c.b16 %v818, %v816
    %v855 = vpack.c.b16 %v821, %v819
    %v856 = vpack.c.b16 %v822, %v820
    %v857 = vpack.c.b16 %v825, %v823
    %v858 = vpack.c.b16 %v826, %v824
    %891 = vmatpush.bf16.msra.mxu0 %v841
    %892 = vmatpush.bf16.msra.mxu0 %v839
    %893 = vmatpush.bf16.msra.mxu0 %v837
    %894 = vmatpush.bf16.msra.mxu0 %v835
    %895 = vmatpush.bf16.msra.mxu0 %v833
    %896 = vmatpush.bf16.msra.mxu0 %v831
    %897 = vmatpush.bf16.msra.mxu0 %v829
    %898 = vmatpush.bf16.msra.mxu0 %v827
    %899 = vmatmul.bf16.gmra.mxu0 %v691
    %v900 = vpop.f32.mrf.mxu0
    %v901 = vadd.f32 %v727, %v900
    %v902 = vpop.f32.mrf.mxu0
    %903 = vdwg.mxu0
    %904 = vmatpush.bf16.msra.mxu0 %v857
    %905 = vmatpush.bf16.msra.mxu0 %v855
    %906 = vmatpush.bf16.msra.mxu0 %v853
    %907 = vmatpush.bf16.msra.mxu0 %v851
    %908 = vmatpush.bf16.msra.mxu0 %v849
    %909 = vmatpush.bf16.msra.mxu0 %v847
    %910 = vmatpush.bf16.msra.mxu0 %v845
    %911 = vmatpush.bf16.msra.mxu0 %v843
    %912 = vmatmul.bf16.gmra.mxu0 %v692
    %v913 = vpop.f32.mrf.mxu0
    %v914 = vadd.f32 %v901, %v913
    %v915 = vpop.f32.mrf.mxu0
    %916 = vdwg.mxu0
    %917 = vmatpush.bf16.msra.mxu0 %v842
    %918 = vmatpush.bf16.msra.mxu0 %v840
    %919 = vmatpush.bf16.msra.mxu0 %v838
    %920 = vmatpush.bf16.msra.mxu0 %v836
    %921 = vmatpush.bf16.msra.mxu0 %v834
    %922 = vmatpush.bf16.msra.mxu0 %v832
    %923 = vmatpush.bf16.msra.mxu0 %v830
    %924 = vmatpush.bf16.msra.mxu0 %v828
    %925 = vmatmul.bf16.gmra.mxu0 %v691
    %v926 = vpop.f32.mrf.mxu0
    %v927 = vadd.f32 %v728, %v926
    %v928 = vpop.f32.mrf.mxu0
    %929 = vdwg.mxu0
    %930 = vmatpush.bf16.msra.mxu0 %v858
    %931 = vmatpush.bf16.msra.mxu0 %v856
    %932 = vmatpush.bf16.msra.mxu0 %v854
    %933 = vmatpush.bf16.msra.mxu0 %v852
    %934 = vmatpush.bf16.msra.mxu0 %v850
    %935 = vmatpush.bf16.msra.mxu0 %v848
    %936 = vmatpush.bf16.msra.mxu0 %v846
    %937 = vmatpush.bf16.msra.mxu0 %v844
    %938 = vmatmul.bf16.gmra.mxu0 %v692
    %v939 = vpop.f32.mrf.mxu0
    %v940 = vadd.f32 %v927, %v939
    %v941 = vpop.f32.mrf.mxu0
    %942 = vdwg.mxu0
    %vm943 = vcmp.gt.f32.partialorder %v914, 0.0
    %vm944 = vcmp.gt.f32.partialorder %v940, 0.0
    %v945 = vmul.f32 %v914, 0.01
    %v946 = vmul.f32 %v940, 0.01
    %v947 = vsel %vm943, %v914, %v945
    %v948 = vsel %vm944, %v940, %v946
    %v949 = vpack.c.bf16 %v947, %v947
    %v950 = vpack.c.bf16 %v948, %v948
    %v951 = vld [vmem:[#allocation8] sm:$0xf]
    %v952 = vld [vmem:[#allocation8 + $0x4] sm:$0xf]
    %v953 = vld [vmem:[#allocation8 + $0x8] sm:$0xf]
    %v954 = vld [vmem:[#allocation8 + $0xc] sm:$0xf]
    %v955 = vld [vmem:[#allocation8 + $0x10] sm:$0xf]
    %v956 = vld [vmem:[#allocation8 + $0x14] sm:$0xf]
    %v957 = vld [vmem:[#allocation8 + $0x18] sm:$0xf]
    %v958 = vld [vmem:[#allocation8 + $0x1c] sm:$0xf]
    %v959 = vld [vmem:[#allocation8 + $0x20] sm:$0xf]
    %v960 = vld [vmem:[#allocation8 + $0x24] sm:$0xf]
    %v961 = vld [vmem:[#allocation8 + $0x28] sm:$0xf]
    %v962 = vld [vmem:[#allocation8 + $0x2c] sm:$0xf]
    %v963 = vld [vmem:[#allocation8 + $0x30] sm:$0xf]
    %v964 = vld [vmem:[#allocation8 + $0x34] sm:$0xf]
    %v965 = vld [vmem:[#allocation8 + $0x38] sm:$0xf]
    %v966 = vld [vmem:[#allocation8 + $0x3c] sm:$0xf]
    %v967 = vld [vmem:[#allocation8 + $0x40] sm:$0xf]
    %v968 = vld [vmem:[#allocation8 + $0x44] sm:$0xf]
    %v969 = vld [vmem:[#allocation8 + $0x48] sm:$0xf]
    %v970 = vld [vmem:[#allocation8 + $0x4c] sm:$0xf]
    %v971 = vld [vmem:[#allocation8 + $0x50] sm:$0xf]
    %v972 = vld [vmem:[#allocation8 + $0x54] sm:$0xf]
    %v973 = vld [vmem:[#allocation8 + $0x58] sm:$0xf]
    %v974 = vld [vmem:[#allocation8 + $0x5c] sm:$0xf]
    %v975 = vld [vmem:[#allocation8 + $0x60] sm:$0xf]
    %v976 = vld [vmem:[#allocation8 + $0x64] sm:$0xf]
    %v977 = vld [vmem:[#allocation8 + $0x68] sm:$0xf]
    %v978 = vld [vmem:[#allocation8 + $0x6c] sm:$0xf]
    %v979 = vld [vmem:[#allocation8 + $0x70] sm:$0xf]
    %v980 = vld [vmem:[#allocation8 + $0x74] sm:$0xf]
    %v981 = vld [vmem:[#allocation8 + $0x78] sm:$0xf]
    %v982 = vld [vmem:[#allocation8 + $0x7c] sm:$0xf]
    %v983 = vld [vmem:[%s10] sm:$0x1]
    %v985 = vperm.slane %v983, 0
    %v1019 = vunpack.c.l.b16 %v951
    %v1020 = vunpack.c.l.b16 %v952
    %v1021 = vunpack.c.l.b16 %v953
    %v1022 = vunpack.c.l.b16 %v954
    %v1023 = vunpack.c.l.b16 %v955
    %v1024 = vunpack.c.l.b16 %v956
    %v1025 = vunpack.c.l.b16 %v957
    %v1026 = vunpack.c.l.b16 %v958
    %v1027 = vunpack.c.l.b16 %v959
    %v1028 = vunpack.c.l.b16 %v960
    %v1029 = vunpack.c.l.b16 %v961
    %v1030 = vunpack.c.l.b16 %v962
    %v1031 = vunpack.c.l.b16 %v963
    %v1032 = vunpack.c.l.b16 %v964
    %v1033 = vunpack.c.l.b16 %v965
    %v1034 = vunpack.c.l.b16 %v966
    %v1035 = vunpack.c.l.b16 %v967
    %v1036 = vunpack.c.l.b16 %v968
    %v1037 = vunpack.c.l.b16 %v969
    %v1038 = vunpack.c.l.b16 %v970
    %v1039 = vunpack.c.l.b16 %v971
    %v1040 = vunpack.c.l.b16 %v972
    %v1041 = vunpack.c.l.b16 %v973
    %v1042 = vunpack.c.l.b16 %v974
    %v1043 = vunpack.c.l.b16 %v975
    %v1044 = vunpack.c.l.b16 %v976
    %v1045 = vunpack.c.l.b16 %v977
    %v1046 = vunpack.c.l.b16 %v978
    %v1047 = vunpack.c.l.b16 %v979
    %v1048 = vunpack.c.l.b16 %v980
    %v1049 = vunpack.c.l.b16 %v981
    %v1050 = vunpack.c.l.b16 %v982
    %v1051 = vpack.c.b16 %v1020, %v1019
    %v1052 = vpack.c.b16 %v1022, %v1021
    %v1053 = vpack.c.b16 %v1024, %v1023
    %v1054 = vpack.c.b16 %v1026, %v1025
    %v1055 = vpack.c.b16 %v1028, %v1027
    %v1056 = vpack.c.b16 %v1030, %v1029
    %v1057 = vpack.c.b16 %v1032, %v1031
    %v1058 = vpack.c.b16 %v1034, %v1033
    %v1059 = vpack.c.b16 %v1036, %v1035
    %v1060 = vpack.c.b16 %v1038, %v1037
    %v1061 = vpack.c.b16 %v1040, %v1039
    %v1062 = vpack.c.b16 %v1042, %v1041
    %v1063 = vpack.c.b16 %v1044, %v1043
    %v1064 = vpack.c.b16 %v1046, %v1045
    %v1065 = vpack.c.b16 %v1048, %v1047
    %v1066 = vpack.c.b16 %v1050, %v1049
    %1083 = vmatpush.bf16.msra.mxu0 %v1058
    %1084 = vmatpush.bf16.msra.mxu0 %v1057
    %1085 = vmatpush.bf16.msra.mxu0 %v1056
    %1086 = vmatpush.bf16.msra.mxu0 %v1055
    %1087 = vmatpush.bf16.msra.mxu0 %v1054
    %1088 = vmatpush.bf16.msra.mxu0 %v1053
    %1089 = vmatpush.bf16.msra.mxu0 %v1052
    %1090 = vmatpush.bf16.msra.mxu0 %v1051
    %1091 = vmatmul.bf16.gmra.mxu0 %v949
    %v1092 = vpop.f32.mrf.mxu0
    %v1093 = vadd.f32 %v985, %v1092
    %v1094 = vpop.f32.mrf.mxu0
    %1095 = vdwg.mxu0
    %1096 = vmatpush.bf16.msra.mxu0 %v1066
    %1097 = vmatpush.bf16.msra.mxu0 %v1065
    %1098 = vmatpush.bf16.msra.mxu0 %v1064
    %1099 = vmatpush.bf16.msra.mxu0 %v1063
    %1100 = vmatpush.bf16.msra.mxu0 %v1062
    %1101 = vmatpush.bf16.msra.mxu0 %v1061
    %1102 = vmatpush.bf16.msra.mxu0 %v1060
    %1103 = vmatpush.bf16.msra.mxu0 %v1059
    %1104 = vmatmul.bf16.gmra.mxu0 %v950
    %v1105 = vpop.f32.mrf.mxu0
    %v1106 = vadd.f32 %v1093, %v1105
    %v1107 = vpop.f32.mrf.mxu0
    %1108 = vdwg.mxu0
    %1109 = vxpose.xlu0.b32.start [1/16] %v1106, 128
    %1110 = vxpose.xlu0.b32.cont [2/16] 0.0, 128
    %1111 = vxpose.xlu0.b32.cont [3/16] 0.0, 128
    %1112 = vxpose.xlu0.b32.cont [4/16] 0.0, 128
    %1113 = vxpose.xlu0.b32.cont [5/16] 0.0, 128
    %1114 = vxpose.xlu0.b32.cont [6/16] 0.0, 128
    %1115 = vxpose.xlu0.b32.cont [7/16] 0.0, 128
    %1116 = vxpose.xlu0.b32.cont [8/16] 0.0, 128
    %1117 = vxpose.xlu0.b32.cont [9/16] 0.0, 128
    %1118 = vxpose.xlu0.b32.cont [10/16] 0.0, 128
    %1119 = vxpose.xlu0.b32.cont [11/16] 0.0, 128
    %1120 = vxpose.xlu0.b32.cont [12/16] 0.0, 128
    %1121 = vxpose.xlu0.b32.cont [13/16] 0.0, 128
    %1122 = vxpose.xlu0.b32.cont [14/16] 0.0, 128
    %1123 = vxpose.xlu0.b32.cont [15/16] 0.0, 128
    %1124 = vxpose.xlu0.b32.end [16/16] 0.0, 128
    %v1125 = vpop.trf.xlu0
    %v1126 = vpop.trf.xlu0
    %v1127 = vpop.trf.xlu0
    %v1128 = vpop.trf.xlu0
    %v1129 = vpop.trf.xlu0
    %v1130 = vpop.trf.xlu0
    %v1131 = vpop.trf.xlu0
    %v1132 = vpop.trf.xlu0
    %v1133 = vpop.trf.xlu0
    %v1134 = vpop.trf.xlu0
    %v1135 = vpop.trf.xlu0
    %v1136 = vpop.trf.xlu0
    %v1137 = vpop.trf.xlu0
    %v1138 = vpop.trf.xlu0
    %v1139 = vpop.trf.xlu0
    %v1140 = vpop.trf.xlu0
    %vm1141 = vcmask 59392
    %1142 = vst.msk [vmem:[#allocation10] sm:$0x7] %vm1141, %v1125
    // Predicated region
    $region62: #{tpu_custom_call.1} parent=1 // pred_check
      _
    $region63: #{tpu_custom_call.1} parent=1 // pred_check_branch
      %1144 = sbr.rel (0) target = $region65
    $region64: #{tpu_custom_call.1} parent=1 // pred_region
      %1146 = vsyncadd [#allocation4], 0
      %s1148 = sshll.u32 [#allocation10], 4
      %s1149 = int_to_ptr.vmem [resolvable:$true] %s1148
      %s1150 = sshll.u32 %s11, 4
      %s1151 = int_to_ptr.hbm [resolvable:$true] %s1150
      %1153 = dma.vmem_to_hbm [thread:$0]  %s1149, 64, %s1151, [#allocation4]
    $region65: #{tpu_custom_call.1} parent=1 // pred_fallthru
      _
    // Predicated region
    $region66: #{tpu_custom_call.1} parent=1 // pred_check
      _
    $region67: #{tpu_custom_call.1} parent=1 // pred_check_branch
      %1155 = sbr.rel (0) target = $region69
    $region68: #{tpu_custom_call.1} parent=1 // pred_region
      %1157 = dma.done [#allocation4], 64
    $region69: #{tpu_custom_call.1} parent=1 // pred_fallthru
      _
    %1158 = vsyncpa [#allocation3], 1
    %1159 = vsyncpa [#allocation6], 1
    %1160 = vsyncpa [#allocation9], 1
    %1161 = vsyncpa [#allocation4], 1

</llo_original>
